<compile_context>
chip_gen: v7x
topology: tpu7x:2x2x1
jax: 0.10.0
libtpu: 0.0.40
codegen_flags: <defaults>
</compile_context>

<pallas_src>
import functools

import numpy as np
import jax
import jax.numpy as jnp
from jax import lax
from jax.experimental import pallas as pl
from jax.experimental.pallas import tpu as pltpu


# --------------------------------------------------------------------------- #
# Kernel body (shared by both input layouts)
# --------------------------------------------------------------------------- #
def _smearing_kernel(dist_ref, out_ref, *, coeff, start, step, resolution):
    # dist_ref: (tile//128, 128) lane-dense  OR  (tile, 1) column layout.
    # out_ref:  (tile, resolution)
    # Offsets are a compile-time linspace; generate them in-register instead of
    # streaming a second input.
    r = lax.broadcasted_iota(jnp.int32, (1, resolution), 1).astype(jnp.float32)
    offset = start + step * r                              # (1, R)
    # Row values broadcast across the resolution (lane) axis.  For the
    # lane-dense layout this reshape is a lanes->sublanes relayout (XLU);
    # for the (tile, 1) fallback layout it is a no-op.
    d = dist_ref[...].reshape(out_ref.shape[0], 1)         # (tile, 1)
    diff = d - offset                                      # (tile, R) f32
    out_ref[...] = jnp.exp(coeff * (diff * diff)).astype(out_ref.dtype)


# --------------------------------------------------------------------------- #
# Tiling / wrapper
# --------------------------------------------------------------------------- #
def _round_up(x, m):
    return ((x + m - 1) // m) * m


def _choose_tiling(n, tile_n):
    """Return (grid_steps, rows_per_step)."""
    # Single step whenever everything fits one tile: v5e/v6e have one
    # TensorCore, so splitting small N only adds ~0.35us per-step overhead.
    if n <= tile_n:
        return 1, _round_up(max(n, 1), 128)
    g = pl.cdiv(n, tile_n)
    # Even step count so v7x's two TensorCores (parallel grid axis) get equal
    # work.  TODO(synk): gate this on the actual TensorCore count
    # (pltpu.get_tpu_info) -- on 1-TC chips it only costs one extra cheap step.
    if g % 2:
        g += 1
    # Multiple of 1024 rows keeps the lane-dense input block (tile//128, 128)
    # a multiple of 8 sublanes.
    tile = _round_up(pl.cdiv(n, g), 1024)
    return g, tile


def _gaussian_smearing_impl(dist, *, start, stop, resolution, width, tile_n,
                            out_dtype, lane_dense):
    n = dist.shape[0]
    coeff = -0.5 / ((stop - start) * width) ** 2
    step = (stop - start) / (resolution - 1) if resolution > 1 else 0.0

    g, tile = _choose_tiling(n, tile_n)
    n_pad = g * tile

    flat = dist if n_pad == n else jnp.zeros((n_pad,), jnp.float32).at[:n].set(dist)

    if lane_dense:
        # Lane-dense input: contiguous HBM, tiny dense VMEM buffers.
        dist_in = flat.reshape(n_pad // 128, 128)
        in_spec = pl.BlockSpec((tile // 128, 128), lambda i: (i, 0))
        in_block_bytes = tile * 4
    else:
        # Fallback: (tile, 1) column blocks (lane-padded in VMEM).
        dist_in = flat.reshape(n_pad, 1)
        in_spec = pl.BlockSpec((tile, 1), lambda i: (i, 0))
        in_block_bytes = tile * 128 * 4

    # Double-buffered, lane-padded VMEM footprint -> explicit scoped-VMEM limit
    # (covers v5e's 16 MiB default; stays well inside v7x's 64 MiB physical).
    out_lanes = _round_up(resolution, 128)
    out_block_bytes = tile * out_lanes * np.dtype(out_dtype).itemsize
    vmem_limit = int(2 * (in_block_bytes + out_block_bytes) + (4 << 20))

    out = pl.pallas_call(
        functools.partial(
            _smearing_kernel,
            coeff=float(coeff),
            start=float(start),
            step=float(step),
            resolution=int(resolution),
        ),
        out_shape=jax.ShapeDtypeStruct((n_pad, resolution), out_dtype),
        grid_spec=pltpu.PrefetchScalarGridSpec(
            num_scalar_prefetch=0,
            grid=(g,),
            in_specs=[in_spec],
            out_specs=pl.BlockSpec((tile, resolution), lambda i: (i, 0)),
        ),
        compiler_params=pltpu.CompilerParams(
            dimension_semantics=("parallel",),
            vmem_limit_bytes=vmem_limit),
    )(dist_in)

    if n_pad != n:
        # TODO(synk): this slice materializes a copy if the consumer does not
        # fuse it; pass the padded array + n downstream to avoid it.
        out = out[:n]
    return out


@functools.cache
def _lane_dense_ok():
    """Probe (once) that Mosaic lowers the lanes->sublanes relayout correctly."""
    try:
        d = jnp.linspace(0.0, 5.0, 2048, dtype=jnp.float32)
        out = _gaussian_smearing_impl(
            d, start=0.0, stop=5.0, resolution=50, width=0.05, tile_n=1024,
            out_dtype=jnp.float32, lane_dense=True)
        out = jax.block_until_ready(out)
        return bool(jnp.allclose(out, _reference(d), atol=5e-5, rtol=1e-5))
    except Exception:
        return False


def gaussian_smearing(dist, *, start=0.0, stop=5.0, resolution=50, width=0.05,
                      tile_n=16384, out_dtype=jnp.float32, lane_dense=None):
    """dist: (N,) float -> (N, resolution) = exp(coeff * (d - offset)^2).

    out_dtype=jnp.bfloat16 halves the (dominant) output HBM traffic; use it
    when the downstream consumer tolerates bf16.
    """
    dist = jnp.asarray(dist, jnp.float32).reshape(-1)
    n = dist.shape[0]
    if n == 0:
        return jnp.zeros((0, resolution), out_dtype)
    if lane_dense is None:
        lane_dense = _lane_dense_ok()
    return _gaussian_smearing_impl(
        dist, start=start, stop=stop, resolution=resolution, width=width,
        tile_n=tile_n, out_dtype=out_dtype, lane_dense=lane_dense)


# --------------------------------------------------------------------------- #
# Reference + self-test
# --------------------------------------------------------------------------- #
def _reference(dist, start=0.0, stop=5.0, resolution=50, width=0.05):
    offset = jnp.linspace(start, stop, resolution, dtype=jnp.float32)
    coeff = -0.5 / ((stop - start) * width) ** 2
    d = dist[:, None] - offset[None, :]
    return jnp.exp(coeff * d * d)


if __name__ == "__main__":
    key = jax.random.PRNGKey(0)
    k1, k2 = jax.random.split(key)

    # Small edge-distance vector (not a multiple of 128: exercises padding +
    # the out[:n] slice) -- float32 output, single grid step.
    n_edges = 300
    dist = jax.random.uniform(k1, (n_edges,), jnp.float32, 0.0, 5.0)
    out = jax.block_until_ready(gaussian_smearing(dist))
    ref = _reference(dist)
    assert out.shape == (n_edges, 50), out.shape
    assert out.dtype == jnp.float32, out.dtype
    assert jnp.allclose(out, ref, atol=5e-5, rtol=1e-5), \
        float(jnp.max(jnp.abs(out - ref)))

    # Multi-step grid (even step count for dual-TC chips) + bf16 output option.
    n2 = 3000
    dist2 = jax.random.uniform(k2, (n2,), jnp.float32, 0.0, 5.0)
    out2 = jax.block_until_ready(
        gaussian_smearing(dist2, tile_n=1024, out_dtype=jnp.bfloat16))
    ref2 = _reference(dist2)
    assert out2.shape == (n2, 50), out2.shape
    assert out2.dtype == jnp.bfloat16, out2.dtype
    assert jnp.allclose(out2.astype(jnp.float32), ref2, atol=2e-2), \
        float(jnp.max(jnp.abs(out2.astype(jnp.float32) - ref2)))

    print("KERNEL_OK")
</pallas_src>

<mosaic_0001>
module attributes {stable_mosaic.version = 11 : i64} {
  func.func @_smearing_kernel(%arg0: i32, %arg1: memref<8x128xf32, #tpu.memory_space<vmem>>, %arg2: memref<1024x50xf32, #tpu.memory_space<vmem>>) attributes {dimension_semantics = [#tpu.dimension_semantics<parallel>], iteration_bounds = array<i64: 2>, scalar_prefetch = 0 : i64, scratch_operands = 0 : i64, tpu.core_type = #tpu.core_type<tc>, window_params = [{transform_indices = @transform_0, window_bounds = array<i64: 8, 128>}, {transform_indices = @transform_1, window_bounds = array<i64: 1024, 50>}]} {
    %0 = tpu.iota {dimensions = array<i32: 1>} : vector<1x50xi32>
    %1 = arith.sitofp %0 : vector<1x50xi32> to vector<1x50xf32>
    %cst = arith.constant 0.10204082 : f32
    %2 = vector.broadcast %cst : f32 to vector<1x50xf32>
    %3 = arith.mulf %2, %1 : vector<1x50xf32>
    %cst_0 = arith.constant 0.000000e+00 : f32
    %4 = vector.broadcast %cst_0 : f32 to vector<1x50xf32>
    %5 = arith.addf %4, %3 : vector<1x50xf32>
    %c0 = arith.constant 0 : index
    %c0_1 = arith.constant 0 : index
    %6 = vector.load %arg1[%c0, %c0_1] : memref<8x128xf32, #tpu.memory_space<vmem>>, vector<8x128xf32>
    %7 = vector.shape_cast %6 : vector<8x128xf32> to vector<1024x1xf32>
    %8 = vector.broadcast %7 : vector<1024x1xf32> to vector<1024x50xf32>
    %9 = vector.broadcast %5 : vector<1x50xf32> to vector<1024x50xf32>
    %10 = arith.subf %8, %9 : vector<1024x50xf32>
    %11 = arith.mulf %10, %10 : vector<1024x50xf32>
    %cst_2 = arith.constant -8.000000e+00 : f32
    %12 = vector.broadcast %cst_2 : f32 to vector<1024x50xf32>
    %13 = arith.mulf %12, %11 : vector<1024x50xf32>
    %14 = math.exp %13 : vector<1024x50xf32>
    %c0_3 = arith.constant 0 : index
    %c0_4 = arith.constant 0 : index
    %15 = vector.load %arg2[%c0_3, %c0_4] : memref<1024x50xf32, #tpu.memory_space<vmem>>, vector<1024x50xf32>
    tpu.vector_store %arg2[%c0_3, %c0_4], %14 {strides = array<i32>} : memref<1024x50xf32, #tpu.memory_space<vmem>>, vector<1024x50xf32>,
    return
  }
  func.func @transform_0(%arg0: i32) -> (i32, i32) {
    %c0_i32 = arith.constant 0 : i32
    %c0_i32_0 = arith.constant 0 : i32
    return %arg0, %c0_i32 : i32, i32
  }
  func.func @transform_1(%arg0: i32) -> (i32, i32) {
    %c0_i32 = arith.constant 0 : i32
    %c0_i32_0 = arith.constant 0 : i32
    return %arg0, %c0_i32 : i32, i32
  }
}

module attributes {stable_mosaic.version = 11 : i64} {
  func.func @_smearing_kernel(%arg0: i32, %arg1: memref<384x1xf32, #tpu.memory_space<vmem>>, %arg2: memref<384x50xf32, #tpu.memory_space<vmem>>) attributes {dimension_semantics = [#tpu.dimension_semantics<parallel>], iteration_bounds = array<i64: 1>, scalar_prefetch = 0 : i64, scratch_operands = 0 : i64, tpu.core_type = #tpu.core_type<tc>, window_params = [{transform_indices = @transform_0, window_bounds = array<i64: 384, 1>}, {transform_indices = @transform_1, window_bounds = array<i64: 384, 50>}]} {
    %0 = tpu.iota {dimensions = array<i32: 1>} : vector<1x50xi32>
    %1 = arith.sitofp %0 : vector<1x50xi32> to vector<1x50xf32>
    %cst = arith.constant 0.10204082 : f32
    %2 = vector.broadcast %cst : f32 to vector<1x50xf32>
    %3 = arith.mulf %2, %1 : vector<1x50xf32>
    %cst_0 = arith.constant 0.000000e+00 : f32
    %4 = vector.broadcast %cst_0 : f32 to vector<1x50xf32>
    %5 = arith.addf %4, %3 : vector<1x50xf32>
    %c0 = arith.constant 0 : index
    %c0_1 = arith.constant 0 : index
    %6 = vector.load %arg1[%c0, %c0_1] : memref<384x1xf32, #tpu.memory_space<vmem>>, vector<384x1xf32>
    %7 = vector.broadcast %6 : vector<384x1xf32> to vector<384x50xf32>
    %8 = vector.broadcast %5 : vector<1x50xf32> to vector<384x50xf32>
    %9 = arith.subf %7, %8 : vector<384x50xf32>
    %10 = arith.mulf %9, %9 : vector<384x50xf32>
    %cst_2 = arith.constant -8.000000e+00 : f32
    %11 = vector.broadcast %cst_2 : f32 to vector<384x50xf32>
    %12 = arith.mulf %11, %10 : vector<384x50xf32>
    %13 = math.exp %12 : vector<384x50xf32>
    %c0_3 = arith.constant 0 : index
    %c0_4 = arith.constant 0 : index
    %14 = vector.load %arg2[%c0_3, %c0_4] : memref<384x50xf32, #tpu.memory_space<vmem>>, vector<384x50xf32>
    tpu.vector_store %arg2[%c0_3, %c0_4], %13 {strides = array<i32>} : memref<384x50xf32, #tpu.memory_space<vmem>>, vector<384x50xf32>,
    return
  }
  func.func @transform_0(%arg0: i32) -> (i32, i32) {
    %c0_i32 = arith.constant 0 : i32
    %c0_i32_0 = arith.constant 0 : i32
    return %arg0, %c0_i32 : i32, i32
  }
  func.func @transform_1(%arg0: i32) -> (i32, i32) {
    %c0_i32 = arith.constant 0 : i32
    %c0_i32_0 = arith.constant 0 : i32
    return %arg0, %c0_i32 : i32, i32
  }
}

</mosaic_0001>

<llo_original>
// kernel: tpu_custom_call.1
$region0: #{tpu_custom_call.1}
  #allocation0 [shape = 'u32[]', space=smem, size = 0x4, offset = 0x4, fixed_abs, tag = 'smem constant byte address 0x4 - core index']
  #allocation1 [shape = 'u32[144,128]{1,0:T(1,128)}', space=vmem, size = 0x12000, scoped, tag = 'internal scratch']
  %s0 = inlined_call_operand.vmem [shape: f32[384,1], index: 0, kind: input, shape index: {}]
  %s1 = inlined_call_operand.vmem [shape: f32[384,50], index: 1, kind: output, shape index: {}]
  %s2 = sld [smem:[#allocation0]]
  $region14: #{tpu_custom_call.1} parent=0
    _
  %s4 = ssub.s32 1, %s2
  %s5 = scalar_select 0, %s4, %s2
  // Predicated region
  $region2: #{tpu_custom_call.1} parent=0 // pred_check
    _
  $region3: #{tpu_custom_call.1} parent=0 // pred_check_branch
    %7 = sbr.rel (0) target = $region5
  $region4: #{tpu_custom_call.1} parent=0 // pred_region
    _
  $region5: #{tpu_custom_call.1} parent=0 // pred_fallthru
    _
  %v8 = vlaneseq
  %v9 = vand.u32 %v8, 127
  %v10 = vcvt.s32.f32 %v9
  %v11 = vmul.f32 %v10, 0.10204082
  %v12 = vadd.f32 %v11, 0.0
  %v13 = vld [vmem:[%s0] sm:$0xff]
  %v14 = vld [vmem:[%s0 + $0x8] sm:$0xff]
  %v15 = vld [vmem:[%s0 + $0x10] sm:$0xff]
  %v16 = vld [vmem:[%s0 + $0x18] sm:$0xff]
  %v17 = vld [vmem:[%s0 + $0x20] sm:$0xff]
  %v18 = vld [vmem:[%s0 + $0x28] sm:$0xff]
  %v19 = vld [vmem:[%s0 + $0x30] sm:$0xff]
  %v20 = vld [vmem:[%s0 + $0x38] sm:$0xff]
  %v21 = vld [vmem:[%s0 + $0x40] sm:$0xff]
  %v22 = vld [vmem:[%s0 + $0x48] sm:$0xff]
  %v23 = vld [vmem:[%s0 + $0x50] sm:$0xff]
  %v24 = vld [vmem:[%s0 + $0x58] sm:$0xff]
  %v25 = vld [vmem:[%s0 + $0x60] sm:$0xff]
  %v26 = vld [vmem:[%s0 + $0x68] sm:$0xff]
  %v27 = vld [vmem:[%s0 + $0x70] sm:$0xff]
  %v28 = vld [vmem:[%s0 + $0x78] sm:$0xff]
  %v29 = vld [vmem:[%s0 + $0x80] sm:$0xff]
  %v30 = vld [vmem:[%s0 + $0x88] sm:$0xff]
  %v31 = vld [vmem:[%s0 + $0x90] sm:$0xff]
  %v32 = vld [vmem:[%s0 + $0x98] sm:$0xff]
  %v33 = vld [vmem:[%s0 + $0xa0] sm:$0xff]
  %v34 = vld [vmem:[%s0 + $0xa8] sm:$0xff]
  %v35 = vld [vmem:[%s0 + $0xb0] sm:$0xff]
  %v36 = vld [vmem:[%s0 + $0xb8] sm:$0xff]
  %v37 = vld [vmem:[%s0 + $0xc0] sm:$0xff]
  %v38 = vld [vmem:[%s0 + $0xc8] sm:$0xff]
  %v39 = vld [vmem:[%s0 + $0xd0] sm:$0xff]
  %v40 = vld [vmem:[%s0 + $0xd8] sm:$0xff]
  %v41 = vld [vmem:[%s0 + $0xe0] sm:$0xff]
  %v42 = vld [vmem:[%s0 + $0xe8] sm:$0xff]
  %v43 = vld [vmem:[%s0 + $0xf0] sm:$0xff]
  %v44 = vld [vmem:[%s0 + $0xf8] sm:$0xff]
  %v45 = vld [vmem:[%s0 + $0x100] sm:$0xff]
  %v46 = vld [vmem:[%s0 + $0x108] sm:$0xff]
  %v47 = vld [vmem:[%s0 + $0x110] sm:$0xff]
  %v48 = vld [vmem:[%s0 + $0x118] sm:$0xff]
  %v49 = vld [vmem:[%s0 + $0x120] sm:$0xff]
  %v50 = vld [vmem:[%s0 + $0x128] sm:$0xff]
  %v51 = vld [vmem:[%s0 + $0x130] sm:$0xff]
  %v52 = vld [vmem:[%s0 + $0x138] sm:$0xff]
  %v53 = vld [vmem:[%s0 + $0x140] sm:$0xff]
  %v54 = vld [vmem:[%s0 + $0x148] sm:$0xff]
  %v55 = vld [vmem:[%s0 + $0x150] sm:$0xff]
  %v56 = vld [vmem:[%s0 + $0x158] sm:$0xff]
  %v57 = vld [vmem:[%s0 + $0x160] sm:$0xff]
  %v58 = vld [vmem:[%s0 + $0x168] sm:$0xff]
  %v59 = vld [vmem:[%s0 + $0x170] sm:$0xff]
  %v60 = vld [vmem:[%s0 + $0x178] sm:$0xff]
  %62 = vset.pattern.permute.xlu0 0
  %63 = vperm.xlu0 %62, %v13
  %v64 = vpop.permute.xlu0 %63
  %67 = vset.pattern.permute.xlu0 0
  %68 = vperm.xlu0 %67, %v14
  %v69 = vpop.permute.xlu0 %68
  %72 = vset.pattern.permute.xlu0 0
  %73 = vperm.xlu0 %72, %v15
  %v74 = vpop.permute.xlu0 %73
  %77 = vset.pattern.permute.xlu0 0
  %78 = vperm.xlu0 %77, %v16
  %v79 = vpop.permute.xlu0 %78
  %82 = vset.pattern.permute.xlu0 0
  %83 = vperm.xlu0 %82, %v17
  %v84 = vpop.permute.xlu0 %83
  %87 = vset.pattern.permute.xlu0 0
  %88 = vperm.xlu0 %87, %v18
  %v89 = vpop.permute.xlu0 %88
  %92 = vset.pattern.permute.xlu0 0
  %93 = vperm.xlu0 %92, %v19
  %v94 = vpop.permute.xlu0 %93
  %97 = vset.pattern.permute.xlu0 0
  %98 = vperm.xlu0 %97, %v20
  %v99 = vpop.permute.xlu0 %98
  %102 = vset.pattern.permute.xlu0 0
  %103 = vperm.xlu0 %102, %v21
  %v104 = vpop.permute.xlu0 %103
  %107 = vset.pattern.permute.xlu0 0
  %108 = vperm.xlu0 %107, %v22
  %v109 = vpop.permute.xlu0 %108
  %112 = vset.pattern.permute.xlu0 0
  %113 = vperm.xlu0 %112, %v23
  %v114 = vpop.permute.xlu0 %113
  %117 = vset.pattern.permute.xlu0 0
  %118 = vperm.xlu0 %117, %v24
  %v119 = vpop.permute.xlu0 %118
  %122 = vset.pattern.permute.xlu0 0
  %123 = vperm.xlu0 %122, %v25
  %v124 = vpop.permute.xlu0 %123
  %127 = vset.pattern.permute.xlu0 0
  %128 = vperm.xlu0 %127, %v26
  %v129 = vpop.permute.xlu0 %128
  %132 = vset.pattern.permute.xlu0 0
  %133 = vperm.xlu0 %132, %v27
  %v134 = vpop.permute.xlu0 %133
  %137 = vset.pattern.permute.xlu0 0
  %138 = vperm.xlu0 %137, %v28
  %v139 = vpop.permute.xlu0 %138
  %142 = vset.pattern.permute.xlu0 0
  %143 = vperm.xlu0 %142, %v29
  %v144 = vpop.permute.xlu0 %143
  %147 = vset.pattern.permute.xlu0 0
  %148 = vperm.xlu0 %147, %v30
  %v149 = vpop.permute.xlu0 %148
  %152 = vset.pattern.permute.xlu0 0
  %153 = vperm.xlu0 %152, %v31
  %v154 = vpop.permute.xlu0 %153
  %157 = vset.pattern.permute.xlu0 0
  %158 = vperm.xlu0 %157, %v32
  %v159 = vpop.permute.xlu0 %158
  %162 = vset.pattern.permute.xlu0 0
  %163 = vperm.xlu0 %162, %v33
  %v164 = vpop.permute.xlu0 %163
  %167 = vset.pattern.permute.xlu0 0
  %168 = vperm.xlu0 %167, %v34
  %v169 = vpop.permute.xlu0 %168
  %172 = vset.pattern.permute.xlu0 0
  %173 = vperm.xlu0 %172, %v35
  %v174 = vpop.permute.xlu0 %173
  %177 = vset.pattern.permute.xlu0 0
  %178 = vperm.xlu0 %177, %v36
  %v179 = vpop.permute.xlu0 %178
  %182 = vset.pattern.permute.xlu0 0
  %183 = vperm.xlu0 %182, %v37
  %v184 = vpop.permute.xlu0 %183
  %187 = vset.pattern.permute.xlu0 0
  %188 = vperm.xlu0 %187, %v38
  %v189 = vpop.permute.xlu0 %188
  %192 = vset.pattern.permute.xlu0 0
  %193 = vperm.xlu0 %192, %v39
  %v194 = vpop.permute.xlu0 %193
  %197 = vset.pattern.permute.xlu0 0
  %198 = vperm.xlu0 %197, %v40
  %v199 = vpop.permute.xlu0 %198
  %202 = vset.pattern.permute.xlu0 0
  %203 = vperm.xlu0 %202, %v41
  %v204 = vpop.permute.xlu0 %203
  %207 = vset.pattern.permute.xlu0 0
  %208 = vperm.xlu0 %207, %v42
  %v209 = vpop.permute.xlu0 %208
  %212 = vset.pattern.permute.xlu0 0
  %213 = vperm.xlu0 %212, %v43
  %v214 = vpop.permute.xlu0 %213
  %217 = vset.pattern.permute.xlu0 0
  %218 = vperm.xlu0 %217, %v44
  %v219 = vpop.permute.xlu0 %218
  %222 = vset.pattern.permute.xlu0 0
  %223 = vperm.xlu0 %222, %v45
  %v224 = vpop.permute.xlu0 %223
  %227 = vset.pattern.permute.xlu0 0
  %228 = vperm.xlu0 %227, %v46
  %v229 = vpop.permute.xlu0 %228
  %232 = vset.pattern.permute.xlu0 0
  %233 = vperm.xlu0 %232, %v47
  %v234 = vpop.permute.xlu0 %233
  %237 = vset.pattern.permute.xlu0 0
  %238 = vperm.xlu0 %237, %v48
  %v239 = vpop.permute.xlu0 %238
  %242 = vset.pattern.permute.xlu0 0
  %243 = vperm.xlu0 %242, %v49
  %v244 = vpop.permute.xlu0 %243
  %247 = vset.pattern.permute.xlu0 0
  %248 = vperm.xlu0 %247, %v50
  %v249 = vpop.permute.xlu0 %248
  %252 = vset.pattern.permute.xlu0 0
  %253 = vperm.xlu0 %252, %v51
  %v254 = vpop.permute.xlu0 %253
  %257 = vset.pattern.permute.xlu0 0
  %258 = vperm.xlu0 %257, %v52
  %v259 = vpop.permute.xlu0 %258
  %262 = vset.pattern.permute.xlu0 0
  %263 = vperm.xlu0 %262, %v53
  %v264 = vpop.permute.xlu0 %263
  %267 = vset.pattern.permute.xlu0 0
  %268 = vperm.xlu0 %267, %v54
  %v269 = vpop.permute.xlu0 %268
  %272 = vset.pattern.permute.xlu0 0
  %273 = vperm.xlu0 %272, %v55
  %v274 = vpop.permute.xlu0 %273
  %277 = vset.pattern.permute.xlu0 0
  %278 = vperm.xlu0 %277, %v56
  %v279 = vpop.permute.xlu0 %278
  %282 = vset.pattern.permute.xlu0 0
  %283 = vperm.xlu0 %282, %v57
  %v284 = vpop.permute.xlu0 %283
  %287 = vset.pattern.permute.xlu0 0
  %288 = vperm.xlu0 %287, %v58
  %v289 = vpop.permute.xlu0 %288
  %292 = vset.pattern.permute.xlu0 0
  %293 = vperm.xlu0 %292, %v59
  %v294 = vpop.permute.xlu0 %293
  %297 = vset.pattern.permute.xlu0 0
  %298 = vperm.xlu0 %297, %v60
  %v299 = vpop.permute.xlu0 %298
  %v301 = vsub.f32 %v64, %v12
  %v302 = vsub.f32 %v69, %v12
  %v303 = vsub.f32 %v74, %v12
  %v304 = vsub.f32 %v79, %v12
  %v305 = vsub.f32 %v84, %v12
  %v306 = vsub.f32 %v89, %v12
  %v307 = vsub.f32 %v94, %v12
  %v308 = vsub.f32 %v99, %v12
  %v309 = vsub.f32 %v104, %v12
  %v310 = vsub.f32 %v109, %v12
  %v311 = vsub.f32 %v114, %v12
  %v312 = vsub.f32 %v119, %v12
  %v313 = vsub.f32 %v124, %v12
  %v314 = vsub.f32 %v129, %v12
  %v315 = vsub.f32 %v134, %v12
  %v316 = vsub.f32 %v139, %v12
  %v317 = vsub.f32 %v144, %v12
  %v318 = vsub.f32 %v149, %v12
  %v319 = vsub.f32 %v154, %v12
  %v320 = vsub.f32 %v159, %v12
  %v321 = vsub.f32 %v164, %v12
  %v322 = vsub.f32 %v169, %v12
  %v323 = vsub.f32 %v174, %v12
  %v324 = vsub.f32 %v179, %v12
  %v325 = vsub.f32 %v184, %v12
  %v326 = vsub.f32 %v189, %v12
  %v327 = vsub.f32 %v194, %v12
  %v328 = vsub.f32 %v199, %v12
  %v329 = vsub.f32 %v204, %v12
  %v330 = vsub.f32 %v209, %v12
  %v331 = vsub.f32 %v214, %v12
  %v332 = vsub.f32 %v219, %v12
  %v333 = vsub.f32 %v224, %v12
  %v334 = vsub.f32 %v229, %v12
  %v335 = vsub.f32 %v234, %v12
  %v336 = vsub.f32 %v239, %v12
  %v337 = vsub.f32 %v244, %v12
  %v338 = vsub.f32 %v249, %v12
  %v339 = vsub.f32 %v254, %v12
  %v340 = vsub.f32 %v259, %v12
  %v341 = vsub.f32 %v264, %v12
  %v342 = vsub.f32 %v269, %v12
  %v343 = vsub.f32 %v274, %v12
  %v344 = vsub.f32 %v279, %v12
  %v345 = vsub.f32 %v284, %v12
  %v346 = vsub.f32 %v289, %v12
  %v347 = vsub.f32 %v294, %v12
  %v348 = vsub.f32 %v299, %v12
  %v349 = vmul.f32 %v301, %v301
  %v350 = vmul.f32 %v302, %v302
  %v351 = vmul.f32 %v303, %v303
  %v352 = vmul.f32 %v304, %v304
  %v353 = vmul.f32 %v305, %v305
  %v354 = vmul.f32 %v306, %v306
  %v355 = vmul.f32 %v307, %v307
  %v356 = vmul.f32 %v308, %v308
  %v357 = vmul.f32 %v309, %v309
  %v358 = vmul.f32 %v310, %v310
  %v359 = vmul.f32 %v311, %v311
  %v360 = vmul.f32 %v312, %v312
  %v361 = vmul.f32 %v313, %v313
  %v362 = vmul.f32 %v314, %v314
  %v363 = vmul.f32 %v315, %v315
  %v364 = vmul.f32 %v316, %v316
  %v365 = vmul.f32 %v317, %v317
  %v366 = vmul.f32 %v318, %v318
  %v367 = vmul.f32 %v319, %v319
  %v368 = vmul.f32 %v320, %v320
  %v369 = vmul.f32 %v321, %v321
  %v370 = vmul.f32 %v322, %v322
  %v371 = vmul.f32 %v323, %v323
  %v372 = vmul.f32 %v324, %v324
  %v373 = vmul.f32 %v325, %v325
  %v374 = vmul.f32 %v326, %v326
  %v375 = vmul.f32 %v327, %v327
  %v376 = vmul.f32 %v328, %v328
  %v377 = vmul.f32 %v329, %v329
  %v378 = vmul.f32 %v330, %v330
  %v379 = vmul.f32 %v331, %v331
  %v380 = vmul.f32 %v332, %v332
  %v381 = vmul.f32 %v333, %v333
  %v382 = vmul.f32 %v334, %v334
  %v383 = vmul.f32 %v335, %v335
  %v384 = vmul.f32 %v336, %v336
  %v385 = vmul.f32 %v337, %v337
  %v386 = vmul.f32 %v338, %v338
  %v387 = vmul.f32 %v339, %v339
  %v388 = vmul.f32 %v340, %v340
  %v389 = vmul.f32 %v341, %v341
  %v390 = vmul.f32 %v342, %v342
  %v391 = vmul.f32 %v343, %v343
  %v392 = vmul.f32 %v344, %v344
  %v393 = vmul.f32 %v345, %v345
  %v394 = vmul.f32 %v346, %v346
  %v395 = vmul.f32 %v347, %v347
  %v396 = vmul.f32 %v348, %v348
  %v397 = vmul.f32 %v349, -8.0
  %v398 = vmul.f32 %v350, -8.0
  %v399 = vmul.f32 %v351, -8.0
  %v400 = vmul.f32 %v352, -8.0
  %v401 = vmul.f32 %v353, -8.0
  %v402 = vmul.f32 %v354, -8.0
  %v403 = vmul.f32 %v355, -8.0
  %v404 = vmul.f32 %v356, -8.0
  %v405 = vmul.f32 %v357, -8.0
  %v406 = vmul.f32 %v358, -8.0
  %v407 = vmul.f32 %v359, -8.0
  %v408 = vmul.f32 %v360, -8.0
  %v409 = vmul.f32 %v361, -8.0
  %v410 = vmul.f32 %v362, -8.0
  %v411 = vmul.f32 %v363, -8.0
  %v412 = vmul.f32 %v364, -8.0
  %v413 = vmul.f32 %v365, -8.0
  %v414 = vmul.f32 %v366, -8.0
  %v415 = vmul.f32 %v367, -8.0
  %v416 = vmul.f32 %v368, -8.0
  %v417 = vmul.f32 %v369, -8.0
  %v418 = vmul.f32 %v370, -8.0
  %v419 = vmul.f32 %v371, -8.0
  %v420 = vmul.f32 %v372, -8.0
  %v421 = vmul.f32 %v373, -8.0
  %v422 = vmul.f32 %v374, -8.0
  %v423 = vmul.f32 %v375, -8.0
  %v424 = vmul.f32 %v376, -8.0
  %v425 = vmul.f32 %v377, -8.0
  %v426 = vmul.f32 %v378, -8.0
  %v427 = vmul.f32 %v379, -8.0
  %v428 = vmul.f32 %v380, -8.0
  %v429 = vmul.f32 %v381, -8.0
  %v430 = vmul.f32 %v382, -8.0
  %v431 = vmul.f32 %v383, -8.0
  %v432 = vmul.f32 %v384, -8.0
  %v433 = vmul.f32 %v385, -8.0
  %v434 = vmul.f32 %v386, -8.0
  %v435 = vmul.f32 %v387, -8.0
  %v436 = vmul.f32 %v388, -8.0
  %v437 = vmul.f32 %v389, -8.0
  %v438 = vmul.f32 %v390, -8.0
  %v439 = vmul.f32 %v391, -8.0
  %v440 = vmul.f32 %v392, -8.0
  %v441 = vmul.f32 %v393, -8.0
  %v442 = vmul.f32 %v394, -8.0
  %v443 = vmul.f32 %v395, -8.0
  %v444 = vmul.f32 %v396, -8.0
  %v445 = vmul.f32 %v397, 1.442695
  %v446 = vpow.pop %v445
  %v447 = vmul.f32 %v398, 1.442695
  %v448 = vpow.pop %v447
  %v449 = vmul.f32 %v399, 1.442695
  %v450 = vpow.pop %v449
  %v451 = vmul.f32 %v400, 1.442695
  %v452 = vpow.pop %v451
  %v453 = vmul.f32 %v401, 1.442695
  %v454 = vpow.pop %v453
  %v455 = vmul.f32 %v402, 1.442695
  %v456 = vpow.pop %v455
  %v457 = vmul.f32 %v403, 1.442695
  %v458 = vpow.pop %v457
  %v459 = vmul.f32 %v404, 1.442695
  %v460 = vpow.pop %v459
  %v461 = vmul.f32 %v405, 1.442695
  %v462 = vpow.pop %v461
  %v463 = vmul.f32 %v406, 1.442695
  %v464 = vpow.pop %v463
  %v465 = vmul.f32 %v407, 1.442695
  %v466 = vpow.pop %v465
  %v467 = vmul.f32 %v408, 1.442695
  %v468 = vpow.pop %v467
  %v469 = vmul.f32 %v409, 1.442695
  %v470 = vpow.pop %v469
  %v471 = vmul.f32 %v410, 1.442695
  %v472 = vpow.pop %v471
  %v473 = vmul.f32 %v411, 1.442695
  %v474 = vpow.pop %v473
  %v475 = vmul.f32 %v412, 1.442695
  %v476 = vpow.pop %v475
  %v477 = vmul.f32 %v413, 1.442695
  %v478 = vpow.pop %v477
  %v479 = vmul.f32 %v414, 1.442695
  %v480 = vpow.pop %v479
  %v481 = vmul.f32 %v415, 1.442695
  %v482 = vpow.pop %v481
  %v483 = vmul.f32 %v416, 1.442695
  %v484 = vpow.pop %v483
  %v485 = vmul.f32 %v417, 1.442695
  %v486 = vpow.pop %v485
  %v487 = vmul.f32 %v418, 1.442695
  %v488 = vpow.pop %v487
  %v489 = vmul.f32 %v419, 1.442695
  %v490 = vpow.pop %v489
  %v491 = vmul.f32 %v420, 1.442695
  %v492 = vpow.pop %v491
  %v493 = vmul.f32 %v421, 1.442695
  %v494 = vpow.pop %v493
  %v495 = vmul.f32 %v422, 1.442695
  %v496 = vpow.pop %v495
  %v497 = vmul.f32 %v423, 1.442695
  %v498 = vpow.pop %v497
  %v499 = vmul.f32 %v424, 1.442695
  %v500 = vpow.pop %v499
  %v501 = vmul.f32 %v425, 1.442695
  %v502 = vpow.pop %v501
  %v503 = vmul.f32 %v426, 1.442695
  %v504 = vpow.pop %v503
  %v505 = vmul.f32 %v427, 1.442695
  %v506 = vpow.pop %v505
  %v507 = vmul.f32 %v428, 1.442695
  %v508 = vpow.pop %v507
  %v509 = vmul.f32 %v429, 1.442695
  %v510 = vpow.pop %v509
  %v511 = vmul.f32 %v430, 1.442695
  %v512 = vpow.pop %v511
  %v513 = vmul.f32 %v431, 1.442695
  %v514 = vpow.pop %v513
  %v515 = vmul.f32 %v432, 1.442695
  %v516 = vpow.pop %v515
  %v517 = vmul.f32 %v433, 1.442695
  %v518 = vpow.pop %v517
  %v519 = vmul.f32 %v434, 1.442695
  %v520 = vpow.pop %v519
  %v521 = vmul.f32 %v435, 1.442695
  %v522 = vpow.pop %v521
  %v523 = vmul.f32 %v436, 1.442695
  %v524 = vpow.pop %v523
  %v525 = vmul.f32 %v437, 1.442695
  %v526 = vpow.pop %v525
  %v527 = vmul.f32 %v438, 1.442695
  %v528 = vpow.pop %v527
  %v529 = vmul.f32 %v439, 1.442695
  %v530 = vpow.pop %v529
  %v531 = vmul.f32 %v440, 1.442695
  %v532 = vpow.pop %v531
  %v533 = vmul.f32 %v441, 1.442695
  %v534 = vpow.pop %v533
  %v535 = vmul.f32 %v442, 1.442695
  %v536 = vpow.pop %v535
  %v537 = vmul.f32 %v443, 1.442695
  %v538 = vpow.pop %v537
  %v539 = vmul.f32 %v444, 1.442695
  %v540 = vpow.pop %v539
  %vm541 = vcmask 408576
  %542 = vst.msk [vmem:[%s1] sm:$0xff] %vm541, %v446
  %543 = vst.msk [vmem:[%s1 + $0x8] sm:$0xff] %vm541, %v448
  %544 = vst.msk [vmem:[%s1 + $0x10] sm:$0xff] %vm541, %v450
  %545 = vst.msk [vmem:[%s1 + $0x18] sm:$0xff] %vm541, %v452
  %546 = vst.msk [vmem:[%s1 + $0x20] sm:$0xff] %vm541, %v454
  %547 = vst.msk [vmem:[%s1 + $0x28] sm:$0xff] %vm541, %v456
  %548 = vst.msk [vmem:[%s1 + $0x30] sm:$0xff] %vm541, %v458
  %549 = vst.msk [vmem:[%s1 + $0x38] sm:$0xff] %vm541, %v460
  %550 = vst.msk [vmem:[%s1 + $0x40] sm:$0xff] %vm541, %v462
  %551 = vst.msk [vmem:[%s1 + $0x48] sm:$0xff] %vm541, %v464
  %552 = vst.msk [vmem:[%s1 + $0x50] sm:$0xff] %vm541, %v466
  %553 = vst.msk [vmem:[%s1 + $0x58] sm:$0xff] %vm541, %v468
  %554 = vst.msk [vmem:[%s1 + $0x60] sm:$0xff] %vm541, %v470
  %555 = vst.msk [vmem:[%s1 + $0x68] sm:$0xff] %vm541, %v472
  %556 = vst.msk [vmem:[%s1 + $0x70] sm:$0xff] %vm541, %v474
  %557 = vst.msk [vmem:[%s1 + $0x78] sm:$0xff] %vm541, %v476
  %558 = vst.msk [vmem:[%s1 + $0x80] sm:$0xff] %vm541, %v478
  %559 = vst.msk [vmem:[%s1 + $0x88] sm:$0xff] %vm541, %v480
  %560 = vst.msk [vmem:[%s1 + $0x90] sm:$0xff] %vm541, %v482
  %561 = vst.msk [vmem:[%s1 + $0x98] sm:$0xff] %vm541, %v484
  %562 = vst.msk [vmem:[%s1 + $0xa0] sm:$0xff] %vm541, %v486
  %563 = vst.msk [vmem:[%s1 + $0xa8] sm:$0xff] %vm541, %v488
  %564 = vst.msk [vmem:[%s1 + $0xb0] sm:$0xff] %vm541, %v490
  %565 = vst.msk [vmem:[%s1 + $0xb8] sm:$0xff] %vm541, %v492
  %566 = vst.msk [vmem:[%s1 + $0xc0] sm:$0xff] %vm541, %v494
  %567 = vst.msk [vmem:[%s1 + $0xc8] sm:$0xff] %vm541, %v496
  %568 = vst.msk [vmem:[%s1 + $0xd0] sm:$0xff] %vm541, %v498
  %569 = vst.msk [vmem:[%s1 + $0xd8] sm:$0xff] %vm541, %v500
  %570 = vst.msk [vmem:[%s1 + $0xe0] sm:$0xff] %vm541, %v502
  %571 = vst.msk [vmem:[%s1 + $0xe8] sm:$0xff] %vm541, %v504
  %572 = vst.msk [vmem:[%s1 + $0xf0] sm:$0xff] %vm541, %v506
  %573 = vst.msk [vmem:[%s1 + $0xf8] sm:$0xff] %vm541, %v508
  %574 = vst.msk [vmem:[%s1 + $0x100] sm:$0xff] %vm541, %v510
  %575 = vst.msk [vmem:[%s1 + $0x108] sm:$0xff] %vm541, %v512
  %576 = vst.msk [vmem:[%s1 + $0x110] sm:$0xff] %vm541, %v514
  %577 = vst.msk [vmem:[%s1 + $0x118] sm:$0xff] %vm541, %v516
  %578 = vst.msk [vmem:[%s1 + $0x120] sm:$0xff] %vm541, %v518
  %579 = vst.msk [vmem:[%s1 + $0x128] sm:$0xff] %vm541, %v520
  %580 = vst.msk [vmem:[%s1 + $0x130] sm:$0xff] %vm541, %v522
  %581 = vst.msk [vmem:[%s1 + $0x138] sm:$0xff] %vm541, %v524
  %582 = vst.msk [vmem:[%s1 + $0x140] sm:$0xff] %vm541, %v526
  %583 = vst.msk [vmem:[%s1 + $0x148] sm:$0xff] %vm541, %v528
  %584 = vst.msk [vmem:[%s1 + $0x150] sm:$0xff] %vm541, %v530
  %585 = vst.msk [vmem:[%s1 + $0x158] sm:$0xff] %vm541, %v532
  %586 = vst.msk [vmem:[%s1 + $0x160] sm:$0xff] %vm541, %v534
  %587 = vst.msk [vmem:[%s1 + $0x168] sm:$0xff] %vm541, %v536
  %588 = vst.msk [vmem:[%s1 + $0x170] sm:$0xff] %vm541, %v538
  %589 = vst.msk [vmem:[%s1 + $0x178] sm:$0xff] %vm541, %v540
  // Predicated region
  $region6: #{tpu_custom_call.1} parent=0 // pred_check
    _
  $region7: #{tpu_custom_call.1} parent=0 // pred_check_branch
    %591 = sbr.rel (0) target = $region9
  $region8: #{tpu_custom_call.1} parent=0 // pred_region
    _
  $region9: #{tpu_custom_call.1} parent=0 // pred_fallthru
    _
  // Predicated region
  $region10: #{tpu_custom_call.1} parent=0 // pred_check
    _
  $region11: #{tpu_custom_call.1} parent=0 // pred_check_branch
    %593 = sbr.rel (0) target = $region13
  $region12: #{tpu_custom_call.1} parent=0 // pred_region
    _
  $region13: #{tpu_custom_call.1} parent=0 // pred_fallthru
    _

</llo_original>
